<compile_context>
chip_gen: v5e
topology: v5e:2x2
jax: 0.10.0
libtpu: 0.0.40
codegen_flags: <defaults>
</compile_context>

<pallas_src>
import math

import jax
import jax.numpy as jnp
from jax import lax
from jax.experimental import pallas as pl
from jax.experimental.pallas import tpu as pltpu  # noqa: F401  (TPU backend)

# ---------------- model hyper-params (small, consistent with the module) ----------------
B, S, D = 2, 8, 32          # batch, sequence, dim_model
HEADS = 4
HEAD_DIM = D // HEADS
DIM_FF = 64
LN_EPS = 1e-6
BS = B * S                  # flattened token count
VEC_W = max(2 * D, DIM_FF)  # width of the packed small-vector operand
NEG_INF = -1e30


def _layernorm(x, g, b):
    mu = jnp.mean(x, axis=-1, keepdims=True)
    var = jnp.mean((x - mu) ** 2, axis=-1, keepdims=True)
    return (x - mu) * lax.rsqrt(var + LN_EPS) * g + b


def _gelu_exact(x):
    # F.gelu default = exact erf-based gelu
    return 0.5 * x * (1.0 + lax.erf(x * (1.0 / math.sqrt(2.0))))


def encoder_layer_kernel(
    mask_ref,   # (BS, BS)   additive mask: batch-block-diagonal + key padding (0 / -1e30)
    xb_ref,     # (BS, D)    flattened input_b (query source + residual)
    kv_ref,     # (BS, D)    flattened key/value source (input_a)
    vec_ref,    # (9, VEC_W) packed small vectors (LN params + all biases)
    wq_ref,     # (D, D)     query projection  (in, out)
    wkv_ref,    # (D, 2D)    fused [Wk | Wv]   (in, out)
    woh_ref,    # (HEADS, HEAD_DIM, D) per-head slices of the out projection
    w1_ref,     # (D, DIM_FF)
    w2_ref,     # (DIM_FF, D)
    out_ref,    # (BS, D)
):
    xb = xb_ref[...]
    kv = kv_ref[...]
    vec = vec_ref[...]

    ln1_g = vec[0:1, :D]
    ln1_b = vec[1:2, :D]
    bq    = vec[2:3, :D]
    bkv   = vec[3:4, :2 * D]
    bo    = vec[4:5, :D]
    ln2_g = vec[5:6, :D]
    ln2_b = vec[6:7, :D]
    b1    = vec[7:8, :DIM_FF]
    b2    = vec[8:9, :D]

    # ----- pre-attention LayerNorm on the query -----
    q_in = _layernorm(xb, ln1_g, ln1_b)

    # ----- in-projections: Q separate (layernormed query), K|V fused (raw kv source) -----
    q = jnp.dot(q_in, wq_ref[...], preferred_element_type=jnp.float32) + bq      # (BS, D)
    kvp = jnp.dot(kv, wkv_ref[...], preferred_element_type=jnp.float32) + bkv    # (BS, 2D)
    k = kvp[:, :D]
    v = kvp[:, D:]

    # ----- split heads -> (HEADS, BS, HEAD_DIM) and do batched attention -----
    def split_heads(x):
        return jnp.stack(
            [x[:, h * HEAD_DIM:(h + 1) * HEAD_DIM] for h in range(HEADS)], axis=0)

    qh, kh, vh = split_heads(q), split_heads(k), split_heads(v)

    scale = 1.0 / math.sqrt(HEAD_DIM)
    s = jnp.einsum("hqd,hkd->hqk", qh, kh, preferred_element_type=jnp.float32) * scale
    s = s + mask_ref[...]                              # (BS,BS) broadcasts over heads
    s = s - jnp.max(s, axis=-1, keepdims=True)
    p = jnp.exp(s)
    p = p * pl.reciprocal(jnp.sum(p, axis=-1, keepdims=True), approx=True)

    ctx_h = jnp.einsum("hqk,hkd->hqd", p, vh, preferred_element_type=jnp.float32)  # (H,BS,hd)

    # ----- out projection: per-head matmul, sum over heads (no lane concat) -----
    oh = jnp.einsum("hqd,hdm->hqm", ctx_h, woh_ref[...],
                    preferred_element_type=jnp.float32)                            # (H,BS,D)
    ctx = jnp.sum(oh, axis=0) + bo

    # TODO(synk): nn.Dropout layers are identity here (eval-mode forward pass).
    y = ctx + xb                                       # residual with input_b

    # ----- PositionwiseFeedForward: LN -> Linear -> GELU -> Linear -> residual -----
    z = _layernorm(y, ln2_g, ln2_b)
    h1 = _gelu_exact(jnp.dot(z, w1_ref[...], preferred_element_type=jnp.float32) + b1)
    h2 = jnp.dot(h1, w2_ref[...], preferred_element_type=jnp.float32) + b2

    out_ref[...] = (h2 + y).astype(out_ref.dtype)


def _pack_vectors(p):
    rows = [
        p["ln1_g"], p["ln1_b"],
        p["bq"], jnp.concatenate([p["bk"], p["bv"]], axis=0),
        p["bo"], p["ln2_g"], p["ln2_b"],
        p["b1"], p["b2"],
    ]
    packed = jnp.zeros((len(rows), VEC_W), jnp.float32)
    for i, r in enumerate(rows):
        packed = packed.at[i, :r.shape[0]].set(r.astype(jnp.float32))
    return packed


def transformer_encoder_layer(input_a, input_b, key_padding_mask, params):
    """input_a/input_b: (B,S,D) f32; key_padding_mask: (B,S) bool (True = padded).

    Mirrors TransformerEncoderLayer.forward: query = LayerNorm(input_b), key/value = input_a.
    (PyTorch's `input_a.equal(input_b)` branch is a no-op when equal, so no data-dependent
    host-syncing branch is needed.)
    """
    # Combined additive mask over the flattened (B*S) key axis: forbid attending across
    # batch boundaries and to padded keys.
    key_bias = jnp.where(key_padding_mask.reshape(BS), NEG_INF, 0.0).astype(jnp.float32)
    batch_id = jnp.arange(BS, dtype=jnp.int32) // S
    same_batch = batch_id[:, None] == batch_id[None, :]
    mask2d = jnp.where(same_batch, key_bias[None, :], NEG_INF).astype(jnp.float32)  # (BS,BS)

    xb_flat = input_b.reshape(BS, D).astype(jnp.float32)
    kv_flat = input_a.reshape(BS, D).astype(jnp.float32)

    wkv = jnp.concatenate([params["wk"], params["wv"]], axis=1)       # (D, 2D)
    wo_h = params["wo"].reshape(HEADS, HEAD_DIM, D)                   # per-head out-proj rows
    vec = _pack_vectors(params)

    out_flat = pl.pallas_call(
        encoder_layer_kernel,
        out_shape=jax.ShapeDtypeStruct((BS, D), jnp.float32),
    )(mask2d, xb_flat, kv_flat, vec,
      params["wq"], wkv, wo_h, params["w1"], params["w2"])

    return out_flat.reshape(B, S, D)


# ---------------- pure-JAX reference (mirrors the PyTorch module) ----------------
def reference_forward(input_a, input_b, key_padding_mask, params):
    def ln(x, g, b):
        mu = jnp.mean(x, -1, keepdims=True)
        var = jnp.mean((x - mu) ** 2, -1, keepdims=True)
        return (x - mu) / jnp.sqrt(var + LN_EPS) * g + b

    q_in = ln(input_b, params["ln1_g"], params["ln1_b"])
    q = q_in @ params["wq"] + params["bq"]
    k = input_a @ params["wk"] + params["bk"]
    v = input_a @ params["wv"] + params["bv"]

    def heads(x):  # (B,S,D) -> (B,H,S,hd)
        return x.reshape(B, S, HEADS, HEAD_DIM).transpose(0, 2, 1, 3)

    qh, kh, vh = heads(q), heads(k), heads(v)
    s = jnp.einsum("bhqd,bhkd->bhqk", qh, kh) / math.sqrt(HEAD_DIM)
    s = s + jnp.where(key_padding_mask, NEG_INF, 0.0)[:, None, None, :]
    p = jax.nn.softmax(s, axis=-1)
    ctx = jnp.einsum("bhqk,bhkd->bhqd", p, vh).transpose(0, 2, 1, 3).reshape(B, S, D)
    ctx = ctx @ params["wo"] + params["bo"]
    y = ctx + input_b
    z = ln(y, params["ln2_g"], params["ln2_b"])
    h1 = jax.nn.gelu(z @ params["w1"] + params["b1"], approximate=False)
    h2 = h1 @ params["w2"] + params["b2"]
    return h2 + y


def init_params(key):
    ks = jax.random.split(key, 6)
    scale = 0.05
    return {
        # attention weights stored as (in, out), i.e. already-transposed nn.Linear weights
        "wq": scale * jax.random.normal(ks[0], (D, D), jnp.float32),
        "wk": scale * jax.random.normal(ks[1], (D, D), jnp.float32),
        "wv": scale * jax.random.normal(ks[2], (D, D), jnp.float32),
        "wo": scale * jax.random.normal(ks[3], (D, D), jnp.float32),
        "bq": jnp.zeros((D,), jnp.float32),
        "bk": jnp.zeros((D,), jnp.float32),
        "bv": jnp.zeros((D,), jnp.float32),
        "bo": 0.01 * jnp.ones((D,), jnp.float32),
        # layer norms
        "ln1_g": jnp.ones((D,), jnp.float32),
        "ln1_b": jnp.zeros((D,), jnp.float32),
        "ln2_g": jnp.ones((D,), jnp.float32),
        "ln2_b": jnp.zeros((D,), jnp.float32),
        # feed-forward
        "w1": scale * jax.random.normal(ks[4], (D, DIM_FF), jnp.float32),
        "b1": jnp.zeros((DIM_FF,), jnp.float32),
        "w2": scale * jax.random.normal(ks[5], (DIM_FF, D), jnp.float32),
        "b2": jnp.zeros((D,), jnp.float32),
    }


if __name__ == "__main__":
    key = jax.random.PRNGKey(0)
    k_a, k_b, k_p = jax.random.split(key, 3)

    input_a = jax.random.normal(k_a, (B, S, D), jnp.float32)   # key/value source
    input_b = jax.random.normal(k_b, (B, S, D), jnp.float32)   # query source + residual
    # key_padding_mask: True = position is ignored (padding)
    key_padding_mask = jnp.array(
        [[False] * S,
         [False] * (S - 2) + [True, True]], dtype=bool)

    params = init_params(k_p)

    out = transformer_encoder_layer(input_a, input_b, key_padding_mask, params)
    out = jax.block_until_ready(out)

    ref = reference_forward(input_a, input_b, key_padding_mask, params)
    assert out.shape == (B, S, D)
    assert bool(jnp.all(jnp.isfinite(out)))
    assert bool(jnp.max(jnp.abs(out - ref)) < 2e-2)
    print("KERNEL_OK")
</pallas_src>

<mosaic_0001>
module attributes {stable_mosaic.version = 11 : i64} {
  func.func @encoder_layer_kernel(%arg0: memref<16x16xf32, #tpu.memory_space<vmem>>, %arg1: memref<16x32xf32, #tpu.memory_space<vmem>>, %arg2: memref<16x32xf32, #tpu.memory_space<vmem>>, %arg3: memref<9x64xf32, #tpu.memory_space<vmem>>, %arg4: memref<32x32xf32, #tpu.memory_space<vmem>>, %arg5: memref<32x64xf32, #tpu.memory_space<vmem>>, %arg6: memref<4x8x32xf32, #tpu.memory_space<vmem>>, %arg7: memref<32x64xf32, #tpu.memory_space<vmem>>, %arg8: memref<64x32xf32, #tpu.memory_space<vmem>>, %arg9: memref<16x32xf32, #tpu.memory_space<vmem>>) attributes {dimension_semantics = [], scalar_prefetch = 0 : i64, scratch_operands = 0 : i64, tpu.core_type = #tpu.core_type<tc>} {
    %c0 = arith.constant 0 : index
    %c0_0 = arith.constant 0 : index
    %0 = vector.load %arg1[%c0, %c0_0] : memref<16x32xf32, #tpu.memory_space<vmem>>, vector<16x32xf32>
    %c0_1 = arith.constant 0 : index
    %c0_2 = arith.constant 0 : index
    %1 = vector.load %arg2[%c0_1, %c0_2] : memref<16x32xf32, #tpu.memory_space<vmem>>, vector<16x32xf32>
    %c0_3 = arith.constant 0 : index
    %c0_4 = arith.constant 0 : index
    %2 = vector.load %arg3[%c0_3, %c0_4] : memref<9x64xf32, #tpu.memory_space<vmem>>, vector<9x64xf32>
    %3 = vector.extract_strided_slice %2 {offsets = [0, 0], sizes = [1, 32], strides = [1, 1]} : vector<9x64xf32> to vector<1x32xf32>
    %4 = vector.extract_strided_slice %2 {offsets = [1, 0], sizes = [1, 32], strides = [1, 1]} : vector<9x64xf32> to vector<1x32xf32>
    %5 = vector.extract_strided_slice %2 {offsets = [2, 0], sizes = [1, 32], strides = [1, 1]} : vector<9x64xf32> to vector<1x32xf32>
    %6 = vector.extract_strided_slice %2 {offsets = [3, 0], sizes = [1, 64], strides = [1, 1]} : vector<9x64xf32> to vector<1x64xf32>
    %7 = vector.extract_strided_slice %2 {offsets = [4, 0], sizes = [1, 32], strides = [1, 1]} : vector<9x64xf32> to vector<1x32xf32>
    %8 = vector.extract_strided_slice %2 {offsets = [5, 0], sizes = [1, 32], strides = [1, 1]} : vector<9x64xf32> to vector<1x32xf32>
    %9 = vector.extract_strided_slice %2 {offsets = [6, 0], sizes = [1, 32], strides = [1, 1]} : vector<9x64xf32> to vector<1x32xf32>
    %10 = vector.extract_strided_slice %2 {offsets = [7, 0], sizes = [1, 64], strides = [1, 1]} : vector<9x64xf32> to vector<1x64xf32>
    %11 = vector.extract_strided_slice %2 {offsets = [8, 0], sizes = [1, 32], strides = [1, 1]} : vector<9x64xf32> to vector<1x32xf32>
    %cst = arith.constant dense<0.000000e+00> : vector<16xf32>
    %12 = vector.multi_reduction <add>, %0, %cst [1] : vector<16x32xf32> to vector<16xf32>
    %13 = vector.shape_cast %12 : vector<16xf32> to vector<16x1xf32>
    %cst_5 = arith.constant 3.200000e+01 : f32
    %14 = vector.broadcast %cst_5 : f32 to vector<16x1xf32>
    %15 = arith.divf %13, %14 : vector<16x1xf32>
    %16 = vector.broadcast %15 : vector<16x1xf32> to vector<16x32xf32>
    %17 = arith.subf %0, %16 : vector<16x32xf32>
    %18 = arith.mulf %17, %17 : vector<16x32xf32>
    %cst_6 = arith.constant dense<0.000000e+00> : vector<16xf32>
    %19 = vector.multi_reduction <add>, %18, %cst_6 [1] : vector<16x32xf32> to vector<16xf32>
    %20 = vector.shape_cast %19 : vector<16xf32> to vector<16x1xf32>
    %cst_7 = arith.constant 3.200000e+01 : f32
    %21 = vector.broadcast %cst_7 : f32 to vector<16x1xf32>
    %22 = arith.divf %20, %21 : vector<16x1xf32>
    %23 = vector.broadcast %15 : vector<16x1xf32> to vector<16x32xf32>
    %24 = arith.subf %0, %23 : vector<16x32xf32>
    %cst_8 = arith.constant 9.99999997E-7 : f32
    %25 = vector.broadcast %cst_8 : f32 to vector<16x1xf32>
    %26 = arith.addf %22, %25 : vector<16x1xf32>
    %27 = math.rsqrt %26 : vector<16x1xf32>
    %28 = vector.broadcast %27 : vector<16x1xf32> to vector<16x32xf32>
    %29 = arith.mulf %24, %28 : vector<16x32xf32>
    %30 = vector.broadcast %3 : vector<1x32xf32> to vector<16x32xf32>
    %31 = arith.mulf %29, %30 : vector<16x32xf32>
    %32 = vector.broadcast %4 : vector<1x32xf32> to vector<16x32xf32>
    %33 = arith.addf %31, %32 : vector<16x32xf32>
    %c0_9 = arith.constant 0 : index
    %c0_10 = arith.constant 0 : index
    %34 = vector.load %arg4[%c0_9, %c0_10] : memref<32x32xf32, #tpu.memory_space<vmem>>, vector<32x32xf32>
    %cst_11 = arith.constant dense<0.000000e+00> : vector<16x32xf32>
    %35 = tpu.matmul %33, %34, %cst_11 {dimension_numbers = #tpu.dot_dimension_numbers<[1], [0], [0], [1], [0, 0, 1, 1], [], []>} : vector<16x32xf32>, vector<32x32xf32>, vector<16x32xf32> -> vector<16x32xf32>
    %36 = vector.broadcast %5 : vector<1x32xf32> to vector<16x32xf32>
    %37 = arith.addf %35, %36 : vector<16x32xf32>
    %c0_12 = arith.constant 0 : index
    %c0_13 = arith.constant 0 : index
    %38 = vector.load %arg5[%c0_12, %c0_13] : memref<32x64xf32, #tpu.memory_space<vmem>>, vector<32x64xf32>
    %cst_14 = arith.constant dense<0.000000e+00> : vector<16x64xf32>
    %39 = tpu.matmul %1, %38, %cst_14 {dimension_numbers = #tpu.dot_dimension_numbers<[1], [0], [0], [1], [0, 0, 1, 1], [], []>} : vector<16x32xf32>, vector<32x64xf32>, vector<16x64xf32> -> vector<16x64xf32>
    %40 = vector.broadcast %6 : vector<1x64xf32> to vector<16x64xf32>
    %41 = arith.addf %39, %40 : vector<16x64xf32>
    %42 = vector.extract_strided_slice %41 {offsets = [0, 0], sizes = [16, 32], strides = [1, 1]} : vector<16x64xf32> to vector<16x32xf32>
    %43 = vector.extract_strided_slice %41 {offsets = [0, 32], sizes = [16, 32], strides = [1, 1]} : vector<16x64xf32> to vector<16x32xf32>
    %44 = vector.extract_strided_slice %37 {offsets = [0, 0], sizes = [16, 8], strides = [1, 1]} : vector<16x32xf32> to vector<16x8xf32>
    %45 = vector.extract_strided_slice %37 {offsets = [0, 8], sizes = [16, 8], strides = [1, 1]} : vector<16x32xf32> to vector<16x8xf32>
    %46 = vector.extract_strided_slice %37 {offsets = [0, 16], sizes = [16, 8], strides = [1, 1]} : vector<16x32xf32> to vector<16x8xf32>
    %47 = vector.extract_strided_slice %37 {offsets = [0, 24], sizes = [16, 8], strides = [1, 1]} : vector<16x32xf32> to vector<16x8xf32>
    %48 = vector.shape_cast %44 : vector<16x8xf32> to vector<1x16x8xf32>
    %49 = vector.shape_cast %45 : vector<16x8xf32> to vector<1x16x8xf32>
    %50 = vector.shape_cast %46 : vector<16x8xf32> to vector<1x16x8xf32>
    %51 = vector.shape_cast %47 : vector<16x8xf32> to vector<1x16x8xf32>
    %52 = tpu.concatenate %48, %49, %50, %51 in 0 : vector<1x16x8xf32>, vector<1x16x8xf32>, vector<1x16x8xf32>, vector<1x16x8xf32> -> vector<4x16x8xf32>
    %53 = vector.extract_strided_slice %42 {offsets = [0, 0], sizes = [16, 8], strides = [1, 1]} : vector<16x32xf32> to vector<16x8xf32>
    %54 = vector.extract_strided_slice %42 {offsets = [0, 8], sizes = [16, 8], strides = [1, 1]} : vector<16x32xf32> to vector<16x8xf32>
    %55 = vector.extract_strided_slice %42 {offsets = [0, 16], sizes = [16, 8], strides = [1, 1]} : vector<16x32xf32> to vector<16x8xf32>
    %56 = vector.extract_strided_slice %42 {offsets = [0, 24], sizes = [16, 8], strides = [1, 1]} : vector<16x32xf32> to vector<16x8xf32>
    %57 = vector.shape_cast %53 : vector<16x8xf32> to vector<1x16x8xf32>
    %58 = vector.shape_cast %54 : vector<16x8xf32> to vector<1x16x8xf32>
    %59 = vector.shape_cast %55 : vector<16x8xf32> to vector<1x16x8xf32>
    %60 = vector.shape_cast %56 : vector<16x8xf32> to vector<1x16x8xf32>
    %61 = tpu.concatenate %57, %58, %59, %60 in 0 : vector<1x16x8xf32>, vector<1x16x8xf32>, vector<1x16x8xf32>, vector<1x16x8xf32> -> vector<4x16x8xf32>
    %62 = vector.extract_strided_slice %43 {offsets = [0, 0], sizes = [16, 8], strides = [1, 1]} : vector<16x32xf32> to vector<16x8xf32>
    %63 = vector.extract_strided_slice %43 {offsets = [0, 8], sizes = [16, 8], strides = [1, 1]} : vector<16x32xf32> to vector<16x8xf32>
    %64 = vector.extract_strided_slice %43 {offsets = [0, 16], sizes = [16, 8], strides = [1, 1]} : vector<16x32xf32> to vector<16x8xf32>
    %65 = vector.extract_strided_slice %43 {offsets = [0, 24], sizes = [16, 8], strides = [1, 1]} : vector<16x32xf32> to vector<16x8xf32>
    %66 = vector.shape_cast %62 : vector<16x8xf32> to vector<1x16x8xf32>
    %67 = vector.shape_cast %63 : vector<16x8xf32> to vector<1x16x8xf32>
    %68 = vector.shape_cast %64 : vector<16x8xf32> to vector<1x16x8xf32>
    %69 = vector.shape_cast %65 : vector<16x8xf32> to vector<1x16x8xf32>
    %70 = tpu.concatenate %66, %67, %68, %69 in 0 : vector<1x16x8xf32>, vector<1x16x8xf32>, vector<1x16x8xf32>, vector<1x16x8xf32> -> vector<4x16x8xf32>
    "tpu.trace_start"() <{level = 10 : i32, message = "hqd,hkd->hqk"}> : () -> ()
    %cst_15 = arith.constant dense<0.000000e+00> : vector<4x16x16xf32>
    %71 = tpu.matmul %52, %61, %cst_15 {dimension_numbers = #tpu.dot_dimension_numbers<[2], [2], [1], [1], [0, 0, 0, 1, 1, 1], [0], [0]>} : vector<4x16x8xf32>, vector<4x16x8xf32>, vector<4x16x16xf32> -> vector<4x16x16xf32>
    "tpu.trace_stop"() : () -> ()
    %cst_16 = arith.constant 0.353553385 : f32
    %72 = vector.broadcast %cst_16 : f32 to vector<4x16x16xf32>
    %73 = arith.mulf %71, %72 : vector<4x16x16xf32>
    %c0_17 = arith.constant 0 : index
    %c0_18 = arith.constant 0 : index
    %74 = vector.load %arg0[%c0_17, %c0_18] : memref<16x16xf32, #tpu.memory_space<vmem>>, vector<16x16xf32>
    %75 = vector.shape_cast %74 : vector<16x16xf32> to vector<1x16x16xf32>
    %76 = vector.broadcast %75 : vector<1x16x16xf32> to vector<4x16x16xf32>
    %77 = arith.addf %73, %76 : vector<4x16x16xf32>
    %cst_19 = arith.constant dense<0xFF800000> : vector<4x16xf32>
    %78 = vector.multi_reduction <maximumf>, %77, %cst_19 [2] : vector<4x16x16xf32> to vector<4x16xf32>
    %79 = vector.shape_cast %78 : vector<4x16xf32> to vector<4x16x1xf32>
    %80 = vector.broadcast %79 : vector<4x16x1xf32> to vector<4x16x16xf32>
    %81 = arith.subf %77, %80 : vector<4x16x16xf32>
    %82 = math.exp %81 : vector<4x16x16xf32>
    %cst_20 = arith.constant dense<0.000000e+00> : vector<4x16xf32>
    %83 = vector.multi_reduction <add>, %82, %cst_20 [2] : vector<4x16x16xf32> to vector<4x16xf32>
    %84 = vector.shape_cast %83 : vector<4x16xf32> to vector<4x16x1xf32>
    %85 = tpu.reciprocal %84 {approx = true} : vector<4x16x1xf32> -> vector<4x16x1xf32>
    %86 = vector.broadcast %85 : vector<4x16x1xf32> to vector<4x16x16xf32>
    %87 = arith.mulf %82, %86 : vector<4x16x16xf32>
    "tpu.trace_start"() <{level = 10 : i32, message = "hqk,hkd->hqd"}> : () -> ()
    %cst_21 = arith.constant dense<0.000000e+00> : vector<4x16x8xf32>
    %88 = tpu.matmul %87, %70, %cst_21 {dimension_numbers = #tpu.dot_dimension_numbers<[2], [1], [1], [2], [0, 0, 0, 1, 1, 2], [0], [0]>} : vector<4x16x16xf32>, vector<4x16x8xf32>, vector<4x16x8xf32> -> vector<4x16x8xf32>
    "tpu.trace_stop"() : () -> ()
    %c0_22 = arith.constant 0 : index
    %c0_23 = arith.constant 0 : index
    %c0_24 = arith.constant 0 : index
    %89 = vector.load %arg6[%c0_22, %c0_23, %c0_24] : memref<4x8x32xf32, #tpu.memory_space<vmem>>, vector<4x8x32xf32>
    "tpu.trace_start"() <{level = 10 : i32, message = "hqd,hdm->hqm"}> : () -> ()
    %cst_25 = arith.constant dense<0.000000e+00> : vector<4x16x32xf32>
    %90 = tpu.matmul %88, %89, %cst_25 {dimension_numbers = #tpu.dot_dimension_numbers<[2], [1], [1], [2], [0, 0, 0, 1, 1, 2], [0], [0]>} : vector<4x16x8xf32>, vector<4x8x32xf32>, vector<4x16x32xf32> -> vector<4x16x32xf32>
    "tpu.trace_stop"() : () -> ()
    %cst_26 = arith.constant dense<0.000000e+00> : vector<16x32xf32>
    %91 = vector.multi_reduction <add>, %90, %cst_26 [0] : vector<4x16x32xf32> to vector<16x32xf32>
    %92 = vector.broadcast %7 : vector<1x32xf32> to vector<16x32xf32>
    %93 = arith.addf %91, %92 : vector<16x32xf32>
    %94 = arith.addf %93, %0 : vector<16x32xf32>
    %cst_27 = arith.constant dense<0.000000e+00> : vector<16xf32>
    %95 = vector.multi_reduction <add>, %94, %cst_27 [1] : vector<16x32xf32> to vector<16xf32>
    %96 = vector.shape_cast %95 : vector<16xf32> to vector<16x1xf32>
    %cst_28 = arith.constant 3.200000e+01 : f32
    %97 = vector.broadcast %cst_28 : f32 to vector<16x1xf32>
    %98 = arith.divf %96, %97 : vector<16x1xf32>
    %99 = vector.broadcast %98 : vector<16x1xf32> to vector<16x32xf32>
    %100 = arith.subf %94, %99 : vector<16x32xf32>
    %101 = arith.mulf %100, %100 : vector<16x32xf32>
    %cst_29 = arith.constant dense<0.000000e+00> : vector<16xf32>
    %102 = vector.multi_reduction <add>, %101, %cst_29 [1] : vector<16x32xf32> to vector<16xf32>
    %103 = vector.shape_cast %102 : vector<16xf32> to vector<16x1xf32>
    %cst_30 = arith.constant 3.200000e+01 : f32
    %104 = vector.broadcast %cst_30 : f32 to vector<16x1xf32>
    %105 = arith.divf %103, %104 : vector<16x1xf32>
    %106 = vector.broadcast %98 : vector<16x1xf32> to vector<16x32xf32>
    %107 = arith.subf %94, %106 : vector<16x32xf32>
    %cst_31 = arith.constant 9.99999997E-7 : f32
    %108 = vector.broadcast %cst_31 : f32 to vector<16x1xf32>
    %109 = arith.addf %105, %108 : vector<16x1xf32>
    %110 = math.rsqrt %109 : vector<16x1xf32>
    %111 = vector.broadcast %110 : vector<16x1xf32> to vector<16x32xf32>
    %112 = arith.mulf %107, %111 : vector<16x32xf32>
    %113 = vector.broadcast %8 : vector<1x32xf32> to vector<16x32xf32>
    %114 = arith.mulf %112, %113 : vector<16x32xf32>
    %115 = vector.broadcast %9 : vector<1x32xf32> to vector<16x32xf32>
    %116 = arith.addf %114, %115 : vector<16x32xf32>
    %c0_32 = arith.constant 0 : index
    %c0_33 = arith.constant 0 : index
    %117 = vector.load %arg7[%c0_32, %c0_33] : memref<32x64xf32, #tpu.memory_space<vmem>>, vector<32x64xf32>
    %cst_34 = arith.constant dense<0.000000e+00> : vector<16x64xf32>
    %118 = tpu.matmul %116, %117, %cst_34 {dimension_numbers = #tpu.dot_dimension_numbers<[1], [0], [0], [1], [0, 0, 1, 1], [], []>} : vector<16x32xf32>, vector<32x64xf32>, vector<16x64xf32> -> vector<16x64xf32>
    %119 = vector.broadcast %10 : vector<1x64xf32> to vector<16x64xf32>
    %120 = arith.addf %118, %119 : vector<16x64xf32>
    %cst_35 = arith.constant 5.000000e-01 : f32
    %121 = vector.broadcast %cst_35 : f32 to vector<16x64xf32>
    %122 = arith.mulf %121, %120 : vector<16x64xf32>
    %cst_36 = arith.constant 0.707106769 : f32
    %123 = vector.broadcast %cst_36 : f32 to vector<16x64xf32>
    %124 = arith.mulf %120, %123 : vector<16x64xf32>
    %125 = math.erf %124 : vector<16x64xf32>
    %cst_37 = arith.constant 1.000000e+00 : f32
    %126 = vector.broadcast %cst_37 : f32 to vector<16x64xf32>
    %127 = arith.addf %126, %125 : vector<16x64xf32>
    %128 = arith.mulf %122, %127 : vector<16x64xf32>
    %c0_38 = arith.constant 0 : index
    %c0_39 = arith.constant 0 : index
    %129 = vector.load %arg8[%c0_38, %c0_39] : memref<64x32xf32, #tpu.memory_space<vmem>>, vector<64x32xf32>
    %cst_40 = arith.constant dense<0.000000e+00> : vector<16x32xf32>
    %130 = tpu.matmul %128, %129, %cst_40 {dimension_numbers = #tpu.dot_dimension_numbers<[1], [0], [0], [1], [0, 0, 1, 1], [], []>} : vector<16x64xf32>, vector<64x32xf32>, vector<16x32xf32> -> vector<16x32xf32>
    %131 = vector.broadcast %11 : vector<1x32xf32> to vector<16x32xf32>
    %132 = arith.addf %130, %131 : vector<16x32xf32>
    %133 = arith.addf %132, %94 : vector<16x32xf32>
    %c0_41 = arith.constant 0 : index
    %c0_42 = arith.constant 0 : index
    %134 = vector.load %arg9[%c0_41, %c0_42] : memref<16x32xf32, #tpu.memory_space<vmem>>, vector<16x32xf32>
    tpu.vector_store %arg9[%c0_41, %c0_42], %133 {strides = array<i32>} : memref<16x32xf32, #tpu.memory_space<vmem>>, vector<16x32xf32>,
    return
  }
}

</mosaic_0001>

<llo_original>
// kernel: tpu_custom_call.1
$region0: #{tpu_custom_call.1}
  #allocation0 [shape = 'u32[]', space=smem, size = 0x4, offset = 0x4, fixed_abs, tag = 'smem constant byte address 0x4 - core index']
  #allocation1 [shape = 'u32[72,128]{1,0:T(1,128)}', space=vmem, size = 0x9000, scoped, tag = 'internal scratch']
  %s0 = inlined_call_operand.hbm [shape: f32[16,16], index: 0, kind: input, shape index: {}]
  %s1 = inlined_call_operand.hbm [shape: f32[16,32], index: 1, kind: input, shape index: {}]
  %s2 = inlined_call_operand.hbm [shape: f32[16,32], index: 2, kind: input, shape index: {}]
  %s3 = inlined_call_operand.hbm [shape: f32[9,64], index: 3, kind: input, shape index: {}]
  %s4 = inlined_call_operand.vmem [shape: f32[32,32], index: 4, kind: input, shape index: {}]
  %s5 = inlined_call_operand.vmem [shape: f32[32,64], index: 5, kind: input, shape index: {}]
  %s6 = inlined_call_operand.vmem [shape: f32[4,8,32], index: 6, kind: input, shape index: {}]
  %s7 = inlined_call_operand.hbm [shape: f32[32,64], index: 7, kind: input, shape index: {}]
  %s8 = inlined_call_operand.vmem [shape: f32[64,32], index: 8, kind: input, shape index: {}]
  %s9 = inlined_call_operand.hbm [shape: f32[16,32], index: 9, kind: output, shape index: {}]
  %s10 = sld [smem:[#allocation0]]
  $region66: #{tpu_custom_call.1} parent=0
    _
  %s12 = ssub.s32 1, %s10
  %s13 = scalar_select 0, %s12, %s10
  $region1: #{tpu_custom_call.1} parent=0
    #allocation2 [shape = 'u8[8192]{0}', space=vmem, size = 0x2000, scoped, tag = 'input window, operand 0, single buffered']
    #allocation3 [shape = 's32[1]{0}', space=sflag, size = 0x4, scoped, tag = 'scoped memory for tpu_custom_call.1']
    #allocation4 [shape = 's32[1]{0}', space=sflag, size = 0x4, scoped, tag = 'scoped memory for tpu_custom_call.1']
    #allocation5 [shape = 'u8[8192]{0}', space=vmem, size = 0x2000, scoped, tag = 'input window, operand 1, single buffered']
    #allocation6 [shape = 's32[1]{0}', space=sflag, size = 0x4, scoped, tag = 'scoped memory for tpu_custom_call.1']
    #allocation7 [shape = 'u8[8192]{0}', space=vmem, size = 0x2000, scoped, tag = 'input window, operand 2, single buffered']
    #allocation8 [shape = 'u8[8192]{0}', space=vmem, size = 0x2000, scoped, tag = 'input window, operand 3, single buffered']
    #allocation9 [shape = 's32[1]{0}', space=sflag, size = 0x4, scoped, tag = 'scoped memory for tpu_custom_call.1']
    #allocation10 [shape = 'u8[16384]{0}', space=vmem, size = 0x4000, scoped, tag = 'input window, operand 7, single buffered']
    #allocation11 [shape = 'u8[8192]{0}', space=vmem, size = 0x2000, scoped, tag = 'output window, operand 0, single buffered']
    %14 = vsyncpa [#allocation3], 0
    %15 = vsyncpa [#allocation6], 0
    %16 = vsyncpa [#allocation9], 0
    %17 = vsyncpa [#allocation4], 0
    // Predicated region
    $region2: #{tpu_custom_call.1} parent=1 // pred_check
      _
    $region3: #{tpu_custom_call.1} parent=1 // pred_check_branch
      %19 = sbr.rel (0) target = $region5
    $region4: #{tpu_custom_call.1} parent=1 // pred_region
      %21 = vsyncadd [#allocation3], 0
      %s22 = sshll.u32 %s0, 4
      %s23 = int_to_ptr.hbm [resolvable:$true] %s22
      %s24 = sshll.u32 [#allocation2], 4
      %s25 = int_to_ptr.vmem [resolvable:$true] %s24
      %30 = dma.hbm_to_vmem [thread:$0]  %s23, 256, %s25, [#allocation3], 128, 128, 8
    $region5: #{tpu_custom_call.1} parent=1 // pred_fallthru
      _
    // Predicated region
    $region6: #{tpu_custom_call.1} parent=1 // pred_check
      _
    $region7: #{tpu_custom_call.1} parent=1 // pred_check_branch
      %32 = sbr.rel (0) target = $region9
    $region8: #{tpu_custom_call.1} parent=1 // pred_region
      %34 = vsyncadd [#allocation6], 0
      %s35 = sshll.u32 %s1, 4
      %s36 = int_to_ptr.hbm [resolvable:$true] %s35
      %s37 = sshll.u32 [#allocation5], 4
      %s38 = int_to_ptr.vmem [resolvable:$true] %s37
      %43 = dma.hbm_to_vmem [thread:$0]  %s36, 256, %s38, [#allocation6], 128, 128, 8
    $region9: #{tpu_custom_call.1} parent=1 // pred_fallthru
      _
    // Predicated region
    $region10: #{tpu_custom_call.1} parent=1 // pred_check
      _
    $region11: #{tpu_custom_call.1} parent=1 // pred_check_branch
      %45 = sbr.rel (0) target = $region13
    $region12: #{tpu_custom_call.1} parent=1 // pred_region
      %47 = vsyncadd [#allocation6], 0
      %s48 = sshll.u32 %s2, 4
      %s49 = int_to_ptr.hbm [resolvable:$true] %s48
      %s50 = sshll.u32 [#allocation7], 4
      %s51 = int_to_ptr.vmem [resolvable:$true] %s50
      %56 = dma.hbm_to_vmem [thread:$0]  %s49, 256, %s51, [#allocation6], 128, 128, 8
    $region13: #{tpu_custom_call.1} parent=1 // pred_fallthru
      _
    // Predicated region
    $region14: #{tpu_custom_call.1} parent=1 // pred_check
      _
    $region15: #{tpu_custom_call.1} parent=1 // pred_check_branch
      %58 = sbr.rel (0) target = $region17
    $region16: #{tpu_custom_call.1} parent=1 // pred_region
      %60 = vsyncadd [#allocation9], 0
      %s61 = sshll.u32 %s3, 4
      %s62 = int_to_ptr.hbm [resolvable:$true] %s61
      %s63 = sshll.u32 [#allocation8], 4
      %s64 = int_to_ptr.vmem [resolvable:$true] %s63
      %69 = dma.hbm_to_vmem [thread:$0]  %s62, 256, %s64, [#allocation9], 128, 128, 8
    $region17: #{tpu_custom_call.1} parent=1 // pred_fallthru
      _
    // Predicated region
    $region18: #{tpu_custom_call.1} parent=1 // pred_check
      _
    $region19: #{tpu_custom_call.1} parent=1 // pred_check_branch
      %71 = sbr.rel (0) target = $region21
    $region20: #{tpu_custom_call.1} parent=1 // pred_region
      _
    $region21: #{tpu_custom_call.1} parent=1 // pred_fallthru
      _
    // Predicated region
    $region22: #{tpu_custom_call.1} parent=1 // pred_check
      _
    $region23: #{tpu_custom_call.1} parent=1 // pred_check_branch
      %73 = sbr.rel (0) target = $region25
    $region24: #{tpu_custom_call.1} parent=1 // pred_region
      _
    $region25: #{tpu_custom_call.1} parent=1 // pred_fallthru
      _
    // Predicated region
    $region26: #{tpu_custom_call.1} parent=1 // pred_check
      _
    $region27: #{tpu_custom_call.1} parent=1 // pred_check_branch
      %75 = sbr.rel (0) target = $region29
    $region28: #{tpu_custom_call.1} parent=1 // pred_region
      _
    $region29: #{tpu_custom_call.1} parent=1 // pred_fallthru
      _
    // Predicated region
    $region30: #{tpu_custom_call.1} parent=1 // pred_check
      _
    $region31: #{tpu_custom_call.1} parent=1 // pred_check_branch
      %77 = sbr.rel (0) target = $region33
    $region32: #{tpu_custom_call.1} parent=1 // pred_region
      %79 = vsyncadd [#allocation9], 0
      %s80 = sshll.u32 %s7, 4
      %s81 = int_to_ptr.hbm [resolvable:$true] %s80
      %s82 = sshll.u32 [#allocation10], 4
      %s83 = int_to_ptr.vmem [resolvable:$true] %s82
      %88 = dma.hbm_to_vmem [thread:$0]  %s81, 512, %s83, [#allocation9], 128, 128, 8
    $region33: #{tpu_custom_call.1} parent=1 // pred_fallthru
      _
    // Predicated region
    $region34: #{tpu_custom_call.1} parent=1 // pred_check
      _
    $region35: #{tpu_custom_call.1} parent=1 // pred_check_branch
      %90 = sbr.rel (0) target = $region37
    $region36: #{tpu_custom_call.1} parent=1 // pred_region
      _
    $region37: #{tpu_custom_call.1} parent=1 // pred_fallthru
      _
    // Predicated region
    $region38: #{tpu_custom_call.1} parent=1 // pred_check
      _
    $region39: #{tpu_custom_call.1} parent=1 // pred_check_branch
      %92 = sbr.rel (0) target = $region41
    $region40: #{tpu_custom_call.1} parent=1 // pred_region
      %94 = dma.done [#allocation3], 256
    $region41: #{tpu_custom_call.1} parent=1 // pred_fallthru
      _
    // Predicated region
    $region42: #{tpu_custom_call.1} parent=1 // pred_check
      _
    $region43: #{tpu_custom_call.1} parent=1 // pred_check_branch
      %96 = sbr.rel (0) target = $region45
    $region44: #{tpu_custom_call.1} parent=1 // pred_region
      %98 = dma.done [#allocation6], 256
    $region45: #{tpu_custom_call.1} parent=1 // pred_fallthru
      _
    // Predicated region
    $region46: #{tpu_custom_call.1} parent=1 // pred_check
      _
    $region47: #{tpu_custom_call.1} parent=1 // pred_check_branch
      %100 = sbr.rel (0) target = $region49
    $region48: #{tpu_custom_call.1} parent=1 // pred_region
      %102 = dma.done [#allocation6], 256
    $region49: #{tpu_custom_call.1} parent=1 // pred_fallthru
      _
    // Predicated region
    $region50: #{tpu_custom_call.1} parent=1 // pred_check
      _
    $region51: #{tpu_custom_call.1} parent=1 // pred_check_branch
      %104 = sbr.rel (0) target = $region53
    $region52: #{tpu_custom_call.1} parent=1 // pred_region
      %106 = dma.done [#allocation9], 256
    $region53: #{tpu_custom_call.1} parent=1 // pred_fallthru
      _
    // Predicated region
    $region54: #{tpu_custom_call.1} parent=1 // pred_check
      _
    $region55: #{tpu_custom_call.1} parent=1 // pred_check_branch
      %108 = sbr.rel (0) target = $region57
    $region56: #{tpu_custom_call.1} parent=1 // pred_region
      %110 = dma.done [#allocation9], 512
    $region57: #{tpu_custom_call.1} parent=1 // pred_fallthru
      _
    %v111 = vld [vmem:[#allocation5] sm:$0xff]
    %v112 = vld [vmem:[#allocation5 + $0x8] sm:$0xff]
    %v113 = vld [vmem:[#allocation7] sm:$0xff]
    %v114 = vld [vmem:[#allocation7 + $0x8] sm:$0xff]
    %v115 = vld [vmem:[#allocation8] sm:$0xff]
    %v116 = vld [vmem:[#allocation8 + $0x8] sm:$0x1]
    %vm117 = vcmask 261120
    %v118 = vsel %vm117, %v111, 0.0
    %119 = vadd.xlane.f32.xlu0 %v118
    %v120 = vpop.xlane.xlu0 %119
    %v121 = vsel %vm117, %v112, 0.0
    %122 = vadd.xlane.f32.xlu0 %v121
    %v123 = vpop.xlane.xlu0 %122
    %v124 = vrcp.pop 32.0
    %v125 = vmul.f32 32.0, %v124
    %v126 = vsub.f32 1.0, %v125
    %v127 = vmul.f32 %v124, %v126
    %v128 = vadd.f32 %v124, %v127
    %vm129 = vweird.f32 %v124
    %v130 = vsel %vm129, %v124, %v128
    %v131 = vmul.f32 %v120, %v130
    %v132 = vmul.f32 %v123, %v130
    %v133 = vsub.f32 %v111, %v131
    %v134 = vsub.f32 %v112, %v132
    %v135 = vmul.f32 %v133, %v133
    %v136 = vmul.f32 %v134, %v134
    %v137 = vsel %vm117, %v135, 0.0
    %138 = vadd.xlane.f32.xlu0 %v137
    %v139 = vpop.xlane.xlu0 %138
    %v140 = vsel %vm117, %v136, 0.0
    %141 = vadd.xlane.f32.xlu0 %v140
    %v142 = vpop.xlane.xlu0 %141
    %v143 = vmul.f32 %v139, %v130
    %v144 = vmul.f32 %v142, %v130
    %v145 = vadd.f32 %v143, 1e-06
    %v146 = vadd.f32 %v144, 1e-06
    %v147 = vrsqrt.pop %v145
    %v148 = vmul.f32 %v147, %v145
    %v149 = vmul.f32 %v148, %v147
    %v150 = vmul.f32 0.5, %v149
    %v151 = vsub.f32 1.5, %v150
    %v152 = vmul.f32 %v147, %v151
    %vm153 = vweird.f32 %v145
    %vm154 = vweird.f32 %v147
    %vm155 = vmor %vm153, %vm154
    %v156 = vsel %vm155, %v147, %v152
    %v157 = vrsqrt.pop %v146
    %v158 = vmul.f32 %v157, %v146
    %v159 = vmul.f32 %v158, %v157
    %v160 = vmul.f32 0.5, %v159
    %v161 = vsub.f32 1.5, %v160
    %v162 = vmul.f32 %v157, %v161
    %vm163 = vweird.f32 %v146
    %vm164 = vweird.f32 %v157
    %vm165 = vmor %vm163, %vm164
    %v166 = vsel %vm165, %v157, %v162
    %v167 = vmul.f32 %v133, %v156
    %v168 = vmul.f32 %v134, %v166
    %v169 = vperm.slane %v115, 0
    %v170 = vmul.f32 %v167, %v169
    %v171 = vmul.f32 %v168, %v169
    %v172 = vperm.slane %v115, 1
    %v173 = vadd.f32 %v170, %v172
    %v174 = vadd.f32 %v171, %v172
    %v175 = vld [vmem:[%s4] sm:$0xff]
    %v176 = vld [vmem:[%s4 + $0x8] sm:$0xff]
    %v177 = vld [vmem:[%s4 + $0x10] sm:$0xff]
    %v178 = vld [vmem:[%s4 + $0x18] sm:$0xff]
    %v179 = vperm.slane %v115, 2
    %v181 = vsel %vm117, %v173, 0
    %v184 = vsel %vm117, %v174, 0
    %186 = vmatpush.msra.mxu0 0.0
    %187 = vmatpush.msra.mxu0 0.0
    %188 = vmatpush.msra.mxu0 0.0
    %189 = vmatpush.msra.mxu0 0.0
    %190 = vmatpush.msra.mxu0 0.0
    %191 = vmatpush.msra.mxu0 0.0
    %192 = vmatpush.msra.mxu0 0.0
    %193 = vmatpush.msra.mxu0 0.0
    %194 = vmatpush.msra.mxu0 0.0
    %195 = vmatpush.msra.mxu0 0.0
    %196 = vmatpush.msra.mxu0 0.0
    %197 = vmatpush.msra.mxu0 0.0
    %198 = vmatpush.msra.mxu0 %v178
    %199 = vmatpush.msra.mxu0 %v177
    %200 = vmatpush.msra.mxu0 %v176
    %201 = vmatpush.msra.mxu0 %v175
    %202 = vmatmul.f32.gmra.mxu0 %v181
    %v203 = vpop.f32.mrf.mxu0
    %v204 = vadd.f32 %v179, %v203
    %205 = vmatmul.f32.gmra.mxu0 %v184
    %v206 = vpop.f32.mrf.mxu0
    %v207 = vadd.f32 %v179, %v206
    %208 = vdwg.mxu0
    %v209 = vld [vmem:[%s5] sm:$0xff]
    %v210 = vld [vmem:[%s5 + $0x8] sm:$0xff]
    %v211 = vld [vmem:[%s5 + $0x10] sm:$0xff]
    %v212 = vld [vmem:[%s5 + $0x18] sm:$0xff]
    %v213 = vperm.slane %v115, 3
    %v215 = vsel %vm117, %v113, 0
    %v218 = vsel %vm117, %v114, 0
    %220 = vmatpush.msra.mxu0 0.0
    %221 = vmatpush.msra.mxu0 0.0
    %222 = vmatpush.msra.mxu0 0.0
    %223 = vmatpush.msra.mxu0 0.0
    %224 = vmatpush.msra.mxu0 0.0
    %225 = vmatpush.msra.mxu0 0.0
    %226 = vmatpush.msra.mxu0 0.0
    %227 = vmatpush.msra.mxu0 0.0
    %228 = vmatpush.msra.mxu0 0.0
    %229 = vmatpush.msra.mxu0 0.0
    %230 = vmatpush.msra.mxu0 0.0
    %231 = vmatpush.msra.mxu0 0.0
    %232 = vmatpush.msra.mxu0 %v212
    %233 = vmatpush.msra.mxu0 %v211
    %234 = vmatpush.msra.mxu0 %v210
    %235 = vmatpush.msra.mxu0 %v209
    %236 = vmatmul.f32.gmra.mxu0 %v215
    %v237 = vpop.f32.mrf.mxu0
    %v238 = vadd.f32 %v213, %v237
    %239 = vmatmul.f32.gmra.mxu0 %v218
    %v240 = vpop.f32.mrf.mxu0
    %v241 = vadd.f32 %v213, %v240
    %242 = vdwg.mxu0
    %245 = vrot.lane.b32.xlu0 %v204, 120
    %v246 = vpop.permute.xlu0 %245
    %247 = vrot.lane.b32.xlu0 %v207, 120
    %v248 = vpop.permute.xlu0 %247
    %249 = vrot.lane.b32.xlu0 %v204, 112
    %v250 = vpop.permute.xlu0 %249
    %251 = vrot.lane.b32.xlu0 %v207, 112
    %v252 = vpop.permute.xlu0 %251
    %253 = vrot.lane.b32.xlu0 %v204, 104
    %v254 = vpop.permute.xlu0 %253
    %255 = vrot.lane.b32.xlu0 %v207, 104
    %v256 = vpop.permute.xlu0 %255
    %259 = vrot.lane.b32.xlu0 %v238, 120
    %v260 = vpop.permute.xlu0 %259
    %261 = vrot.lane.b32.xlu0 %v241, 120
    %v262 = vpop.permute.xlu0 %261
    %263 = vrot.lane.b32.xlu0 %v238, 112
    %v264 = vpop.permute.xlu0 %263
    %265 = vrot.lane.b32.xlu0 %v241, 112
    %v266 = vpop.permute.xlu0 %265
    %267 = vrot.lane.b32.xlu0 %v238, 104
    %v268 = vpop.permute.xlu0 %267
    %269 = vrot.lane.b32.xlu0 %v241, 104
    %v270 = vpop.permute.xlu0 %269
    %vm271 = vcmask 64512
    %v272 = vsel %vm271, %v204, 0
    %v274 = vsel %vm271, %v207, 0
    %v276 = vsel %vm271, %v238, 0
    %v278 = vsel %vm271, %v241, 0
    %280 = vmatpush.xpose.msra.mxu0 0.0
    %281 = vmatpush.xpose.msra.mxu0 0.0
    %282 = vmatpush.xpose.msra.mxu0 0.0
    %283 = vmatpush.xpose.msra.mxu0 0.0
    %284 = vmatpush.xpose.msra.mxu0 0.0
    %285 = vmatpush.xpose.msra.mxu0 0.0
    %286 = vmatpush.xpose.msra.mxu0 0.0
    %287 = vmatpush.xpose.msra.mxu0 0.0
    %288 = vmatpush.xpose.msra.mxu0 0.0
    %289 = vmatpush.xpose.msra.mxu0 0.0
    %290 = vmatpush.xpose.msra.mxu0 0.0
    %291 = vmatpush.xpose.msra.mxu0 0.0
    %292 = vmatpush.xpose.msra.mxu0 0.0
    %293 = vmatpush.xpose.msra.mxu0 0.0
    %294 = vmatpush.xpose.msra.mxu0 %v278
    %295 = vmatpush.xpose.msra.mxu0 %v276
    %296 = vmatmul.f32.gmra.mxu0 %v272
    %v297 = vpop.f32.mrf.mxu0
    %v298 = vadd.f32 0.0, %v297
    %299 = vmatmul.f32.gmra.mxu0 %v274
    %v300 = vpop.f32.mrf.mxu0
    %v301 = vadd.f32 0.0, %v300
    %302 = vdwg.mxu0
    %v303 = vsel %vm271, %v246, 0
    %v305 = vsel %vm271, %v248, 0
    %v307 = vsel %vm271, %v260, 0
    %v309 = vsel %vm271, %v262, 0
    %311 = vmatpush.xpose.msra.mxu0 0.0
    %312 = vmatpush.xpose.msra.mxu0 0.0
    %313 = vmatpush.xpose.msra.mxu0 0.0
    %314 = vmatpush.xpose.msra.mxu0 0.0
    %315 = vmatpush.xpose.msra.mxu0 0.0
    %316 = vmatpush.xpose.msra.mxu0 0.0
    %317 = vmatpush.xpose.msra.mxu0 0.0
    %318 = vmatpush.xpose.msra.mxu0 0.0
    %319 = vmatpush.xpose.msra.mxu0 0.0
    %320 = vmatpush.xpose.msra.mxu0 0.0
    %321 = vmatpush.xpose.msra.mxu0 0.0
    %322 = vmatpush.xpose.msra.mxu0 0.0
    %323 = vmatpush.xpose.msra.mxu0 0.0
    %324 = vmatpush.xpose.msra.mxu0 0.0
    %325 = vmatpush.xpose.msra.mxu0 %v309
    %326 = vmatpush.xpose.msra.mxu0 %v307
    %327 = vmatmul.f32.gmra.mxu0 %v303
    %v328 = vpop.f32.mrf.mxu0
    %v329 = vadd.f32 0.0, %v328
    %330 = vmatmul.f32.gmra.mxu0 %v305
    %v331 = vpop.f32.mrf.mxu0
    %v332 = vadd.f32 0.0, %v331
    %333 = vdwg.mxu0
    %v334 = vsel %vm271, %v250, 0
    %v336 = vsel %vm271, %v252, 0
    %v338 = vsel %vm271, %v264, 0
    %v340 = vsel %vm271, %v266, 0
    %342 = vmatpush.xpose.msra.mxu0 0.0
    %343 = vmatpush.xpose.msra.mxu0 0.0
    %344 = vmatpush.xpose.msra.mxu0 0.0
    %345 = vmatpush.xpose.msra.mxu0 0.0
    %346 = vmatpush.xpose.msra.mxu0 0.0
    %347 = vmatpush.xpose.msra.mxu0 0.0
    %348 = vmatpush.xpose.msra.mxu0 0.0
    %349 = vmatpush.xpose.msra.mxu0 0.0
    %350 = vmatpush.xpose.msra.mxu0 0.0
    %351 = vmatpush.xpose.msra.mxu0 0.0
    %352 = vmatpush.xpose.msra.mxu0 0.0
    %353 = vmatpush.xpose.msra.mxu0 0.0
    %354 = vmatpush.xpose.msra.mxu0 0.0
    %355 = vmatpush.xpose.msra.mxu0 0.0
    %356 = vmatpush.xpose.msra.mxu0 %v340
    %357 = vmatpush.xpose.msra.mxu0 %v338
    %358 = vmatmul.f32.gmra.mxu0 %v334
    %v359 = vpop.f32.mrf.mxu0
    %v360 = vadd.f32 0.0, %v359
    %361 = vmatmul.f32.gmra.mxu0 %v336
    %v362 = vpop.f32.mrf.mxu0
    %v363 = vadd.f32 0.0, %v362
    %364 = vdwg.mxu0
    %v365 = vsel %vm271, %v254, 0
    %v367 = vsel %vm271, %v256, 0
    %v369 = vsel %vm271, %v268, 0
    %v371 = vsel %vm271, %v270, 0
    %373 = vmatpush.xpose.msra.mxu0 0.0
    %374 = vmatpush.xpose.msra.mxu0 0.0
    %375 = vmatpush.xpose.msra.mxu0 0.0
    %376 = vmatpush.xpose.msra.mxu0 0.0
    %377 = vmatpush.xpose.msra.mxu0 0.0
    %378 = vmatpush.xpose.msra.mxu0 0.0
    %379 = vmatpush.xpose.msra.mxu0 0.0
    %380 = vmatpush.xpose.msra.mxu0 0.0
    %381 = vmatpush.xpose.msra.mxu0 0.0
    %382 = vmatpush.xpose.msra.mxu0 0.0
    %383 = vmatpush.xpose.msra.mxu0 0.0
    %384 = vmatpush.xpose.msra.mxu0 0.0
    %385 = vmatpush.xpose.msra.mxu0 0.0
    %386 = vmatpush.xpose.msra.mxu0 0.0
    %387 = vmatpush.xpose.msra.mxu0 %v371
    %388 = vmatpush.xpose.msra.mxu0 %v369
    %389 = vmatmul.f32.gmra.mxu0 %v365
    %v390 = vpop.f32.mrf.mxu0
    %v391 = vadd.f32 0.0, %v390
    %392 = vmatmul.f32.gmra.mxu0 %v367
    %v393 = vpop.f32.mrf.mxu0
    %v394 = vadd.f32 0.0, %v393
    %395 = vdwg.mxu0
    %v396 = vmul.f32 %v298, 0.35355338
    %v397 = vmul.f32 %v301, 0.35355338
    %v398 = vmul.f32 %v329, 0.35355338
    %v399 = vmul.f32 %v332, 0.35355338
    %v400 = vmul.f32 %v360, 0.35355338
    %v401 = vmul.f32 %v363, 0.35355338
    %v402 = vmul.f32 %v391, 0.35355338
    %v403 = vmul.f32 %v394, 0.35355338
    %v404 = vld [vmem:[#allocation2] sm:$0xff]
    %v405 = vld [vmem:[#allocation2 + $0x8] sm:$0xff]
    %v406 = vadd.f32 %v396, %v404
    %v407 = vadd.f32 %v397, %v405
    %v408 = vadd.f32 %v398, %v404
    %v409 = vadd.f32 %v399, %v405
    %v410 = vadd.f32 %v400, %v404
    %v411 = vadd.f32 %v401, %v405
    %v412 = vadd.f32 %v402, %v404
    %v413 = vadd.f32 %v403, %v405
    %vm414 = vcmask 130048
    %v415 = vsel %vm414, %v406, -inf
    %416 = vmax.xlane.f32.xlu0 %v415
    %v417 = vpop.xlane.xlu0 %416
    %v418 = vsel %vm414, %v407, -inf
    %419 = vmax.xlane.f32.xlu0 %v418
    %v420 = vpop.xlane.xlu0 %419
    %v421 = vsel %vm414, %v408, -inf
    %422 = vmax.xlane.f32.xlu0 %v421
    %v423 = vpop.xlane.xlu0 %422
    %v424 = vsel %vm414, %v409, -inf
    %425 = vmax.xlane.f32.xlu0 %v424
    %v426 = vpop.xlane.xlu0 %425
    %v427 = vsel %vm414, %v410, -inf
    %428 = vmax.xlane.f32.xlu0 %v427
    %v429 = vpop.xlane.xlu0 %428
    %v430 = vsel %vm414, %v411, -inf
    %431 = vmax.xlane.f32.xlu0 %v430
    %v432 = vpop.xlane.xlu0 %431
    %v433 = vsel %vm414, %v412, -inf
    %434 = vmax.xlane.f32.xlu0 %v433
    %v435 = vpop.xlane.xlu0 %434
    %v436 = vsel %vm414, %v413, -inf
    %437 = vmax.xlane.f32.xlu0 %v436
    %v438 = vpop.xlane.xlu0 %437
    %v439 = vsub.f32 %v406, %v417
    %v440 = vsub.f32 %v407, %v420
    %v441 = vsub.f32 %v408, %v423
    %v442 = vsub.f32 %v409, %v426
    %v443 = vsub.f32 %v410, %v429
    %v444 = vsub.f32 %v411, %v432
    %v445 = vsub.f32 %v412, %v435
    %v446 = vsub.f32 %v413, %v438
    %v447 = vmul.f32 %v439, 1.442695
    %v448 = vpow.pop %v447
    %v449 = vmul.f32 %v440, 1.442695
    %v450 = vpow.pop %v449
    %v451 = vmul.f32 %v441, 1.442695
    %v452 = vpow.pop %v451
    %v453 = vmul.f32 %v442, 1.442695
    %v454 = vpow.pop %v453
    %v455 = vmul.f32 %v443, 1.442695
    %v456 = vpow.pop %v455
    %v457 = vmul.f32 %v444, 1.442695
    %v458 = vpow.pop %v457
    %v459 = vmul.f32 %v445, 1.442695
    %v460 = vpow.pop %v459
    %v461 = vmul.f32 %v446, 1.442695
    %v462 = vpow.pop %v461
    %v463 = vsel %vm414, %v448, 0.0
    %464 = vadd.xlane.f32.xlu0 %v463
    %v465 = vpop.xlane.xlu0 %464
    %v466 = vsel %vm414, %v450, 0.0
    %467 = vadd.xlane.f32.xlu0 %v466
    %v468 = vpop.xlane.xlu0 %467
    %v469 = vsel %vm414, %v452, 0.0
    %470 = vadd.xlane.f32.xlu0 %v469
    %v471 = vpop.xlane.xlu0 %470
    %v472 = vsel %vm414, %v454, 0.0
    %473 = vadd.xlane.f32.xlu0 %v472
    %v474 = vpop.xlane.xlu0 %473
    %v475 = vsel %vm414, %v456, 0.0
    %476 = vadd.xlane.f32.xlu0 %v475
    %v477 = vpop.xlane.xlu0 %476
    %v478 = vsel %vm414, %v458, 0.0
    %479 = vadd.xlane.f32.xlu0 %v478
    %v480 = vpop.xlane.xlu0 %479
    %v481 = vsel %vm414, %v460, 0.0
    %482 = vadd.xlane.f32.xlu0 %v481
    %v483 = vpop.xlane.xlu0 %482
    %v484 = vsel %vm414, %v462, 0.0
    %485 = vadd.xlane.f32.xlu0 %v484
    %v486 = vpop.xlane.xlu0 %485
    %v487 = vrcp.pop %v465
    %v488 = vrcp.pop %v468
    %v489 = vrcp.pop %v471
    %v490 = vrcp.pop %v474
    %v491 = vrcp.pop %v477
    %v492 = vrcp.pop %v480
    %v493 = vrcp.pop %v483
    %v494 = vrcp.pop %v486
    %v495 = vmul.f32 %v448, %v487
    %v496 = vmul.f32 %v450, %v488
    %v497 = vmul.f32 %v452, %v489
    %v498 = vmul.f32 %v454, %v490
    %v499 = vmul.f32 %v456, %v491
    %v500 = vmul.f32 %v458, %v492
    %v501 = vmul.f32 %v460, %v493
    %v502 = vmul.f32 %v462, %v494
    %503 = vrot.lane.b32.xlu0 %v238, 96
    %v504 = vpop.permute.xlu0 %503
    %505 = vrot.lane.b32.xlu0 %v241, 96
    %v506 = vpop.permute.xlu0 %505
    %v510 = vsel %vm414, %v495, 0
    %v513 = vsel %vm414, %v496, 0
    %515 = vmatpush.msra.mxu0 0.0
    %516 = vmatpush.msra.mxu0 0.0
    %517 = vmatpush.msra.mxu0 0.0
    %518 = vmatpush.msra.mxu0 0.0
    %519 = vmatpush.msra.mxu0 0.0
    %520 = vmatpush.msra.mxu0 0.0
    %521 = vmatpush.msra.mxu0 0.0
    %522 = vmatpush.msra.mxu0 0.0
    %523 = vmatpush.msra.mxu0 0.0
    %524 = vmatpush.msra.mxu0 0.0
    %525 = vmatpush.msra.mxu0 0.0
    %526 = vmatpush.msra.mxu0 0.0
    %527 = vmatpush.msra.mxu0 0.0
    %528 = vmatpush.msra.mxu0 0.0
    %529 = vmatpush.msra.mxu0 %v506
    %530 = vmatpush.msra.mxu0 %v504
    %531 = vmatmul.f32.gmra.mxu0 %v510
    %v532 = vpop.f32.mrf.mxu0
    %v533 = vadd.f32 0.0, %v532
    %534 = vmatmul.f32.gmra.mxu0 %v513
    %v535 = vpop.f32.mrf.mxu0
    %v536 = vadd.f32 0.0, %v535
    %537 = vdwg.mxu0
    %538 = vrot.lane.b32.xlu0 %v260, 96
    %v539 = vpop.permute.xlu0 %538
    %540 = vrot.lane.b32.xlu0 %v262, 96
    %v541 = vpop.permute.xlu0 %540
    %v545 = vsel %vm414, %v497, 0
    %v548 = vsel %vm414, %v498, 0
    %550 = vmatpush.msra.mxu0 0.0
    %551 = vmatpush.msra.mxu0 0.0
    %552 = vmatpush.msra.mxu0 0.0
    %553 = vmatpush.msra.mxu0 0.0
    %554 = vmatpush.msra.mxu0 0.0
    %555 = vmatpush.msra.mxu0 0.0
    %556 = vmatpush.msra.mxu0 0.0
    %557 = vmatpush.msra.mxu0 0.0
    %558 = vmatpush.msra.mxu0 0.0
    %559 = vmatpush.msra.mxu0 0.0
    %560 = vmatpush.msra.mxu0 0.0
    %561 = vmatpush.msra.mxu0 0.0
    %562 = vmatpush.msra.mxu0 0.0
    %563 = vmatpush.msra.mxu0 0.0
    %564 = vmatpush.msra.mxu0 %v541
    %565 = vmatpush.msra.mxu0 %v539
    %566 = vmatmul.f32.gmra.mxu0 %v545
    %v567 = vpop.f32.mrf.mxu0
    %v568 = vadd.f32 0.0, %v567
    %569 = vmatmul.f32.gmra.mxu0 %v548
    %v570 = vpop.f32.mrf.mxu0
    %v571 = vadd.f32 0.0, %v570
    %572 = vdwg.mxu0
    %573 = vrot.lane.b32.xlu0 %v264, 96
    %v574 = vpop.permute.xlu0 %573
    %575 = vrot.lane.b32.xlu0 %v266, 96
    %v576 = vpop.permute.xlu0 %575
    %v580 = vsel %vm414, %v499, 0
    %v583 = vsel %vm414, %v500, 0
    %585 = vmatpush.msra.mxu0 0.0
    %586 = vmatpush.msra.mxu0 0.0
    %587 = vmatpush.msra.mxu0 0.0
    %588 = vmatpush.msra.mxu0 0.0
    %589 = vmatpush.msra.mxu0 0.0
    %590 = vmatpush.msra.mxu0 0.0
    %591 = vmatpush.msra.mxu0 0.0
    %592 = vmatpush.msra.mxu0 0.0
    %593 = vmatpush.msra.mxu0 0.0
    %594 = vmatpush.msra.mxu0 0.0
    %595 = vmatpush.msra.mxu0 0.0
    %596 = vmatpush.msra.mxu0 0.0
    %597 = vmatpush.msra.mxu0 0.0
    %598 = vmatpush.msra.mxu0 0.0
    %599 = vmatpush.msra.mxu0 %v576
    %600 = vmatpush.msra.mxu0 %v574
    %601 = vmatmul.f32.gmra.mxu0 %v580
    %v602 = vpop.f32.mrf.mxu0
    %v603 = vadd.f32 0.0, %v602
    %604 = vmatmul.f32.gmra.mxu0 %v583
    %v605 = vpop.f32.mrf.mxu0
    %v606 = vadd.f32 0.0, %v605
    %607 = vdwg.mxu0
    %608 = vrot.lane.b32.xlu0 %v268, 96
    %v609 = vpop.permute.xlu0 %608
    %610 = vrot.lane.b32.xlu0 %v270, 96
    %v611 = vpop.permute.xlu0 %610
    %v615 = vsel %vm414, %v501, 0
    %v618 = vsel %vm414, %v502, 0
    %620 = vmatpush.msra.mxu0 0.0
    %621 = vmatpush.msra.mxu0 0.0
    %622 = vmatpush.msra.mxu0 0.0
    %623 = vmatpush.msra.mxu0 0.0
    %624 = vmatpush.msra.mxu0 0.0
    %625 = vmatpush.msra.mxu0 0.0
    %626 = vmatpush.msra.mxu0 0.0
    %627 = vmatpush.msra.mxu0 0.0
    %628 = vmatpush.msra.mxu0 0.0
    %629 = vmatpush.msra.mxu0 0.0
    %630 = vmatpush.msra.mxu0 0.0
    %631 = vmatpush.msra.mxu0 0.0
    %632 = vmatpush.msra.mxu0 0.0
    %633 = vmatpush.msra.mxu0 0.0
    %634 = vmatpush.msra.mxu0 %v611
    %635 = vmatpush.msra.mxu0 %v609
    %636 = vmatmul.f32.gmra.mxu0 %v615
    %v637 = vpop.f32.mrf.mxu0
    %v638 = vadd.f32 0.0, %v637
    %639 = vmatmul.f32.gmra.mxu0 %v618
    %v640 = vpop.f32.mrf.mxu0
    %v641 = vadd.f32 0.0, %v640
    %642 = vdwg.mxu0
    %v643 = vld [vmem:[%s6] sm:$0xff]
    %v644 = vld [vmem:[%s6 + $0x8] sm:$0xff]
    %v645 = vld [vmem:[%s6 + $0x10] sm:$0xff]
    %v646 = vld [vmem:[%s6 + $0x18] sm:$0xff]
    %v648 = vsel %vm271, %v533, 0
    %v651 = vsel %vm271, %v536, 0
    %653 = vmatpush.msra.mxu0 0.0
    %654 = vmatpush.msra.mxu0 0.0
    %655 = vmatpush.msra.mxu0 0.0
    %656 = vmatpush.msra.mxu0 0.0
    %657 = vmatpush.msra.mxu0 0.0
    %658 = vmatpush.msra.mxu0 0.0
    %659 = vmatpush.msra.mxu0 0.0
    %660 = vmatpush.msra.mxu0 0.0
    %661 = vmatpush.msra.mxu0 0.0
    %662 = vmatpush.msra.mxu0 0.0
    %663 = vmatpush.msra.mxu0 0.0
    %664 = vmatpush.msra.mxu0 0.0
    %665 = vmatpush.msra.mxu0 0.0
    %666 = vmatpush.msra.mxu0 0.0
    %667 = vmatpush.msra.mxu0 0.0
    %668 = vmatpush.msra.mxu0 %v643
    %669 = vmatmul.f32.gmra.mxu0 %v648
    %v670 = vpop.f32.mrf.mxu0
    %v671 = vadd.f32 0.0, %v670
    %672 = vmatmul.f32.gmra.mxu0 %v651
    %v673 = vpop.f32.mrf.mxu0
    %v674 = vadd.f32 0.0, %v673
    %675 = vdwg.mxu0
    %v677 = vsel %vm271, %v568, 0
    %v680 = vsel %vm271, %v571, 0
    %682 = vmatpush.msra.mxu0 0.0
    %683 = vmatpush.msra.mxu0 0.0
    %684 = vmatpush.msra.mxu0 0.0
    %685 = vmatpush.msra.mxu0 0.0
    %686 = vmatpush.msra.mxu0 0.0
    %687 = vmatpush.msra.mxu0 0.0
    %688 = vmatpush.msra.mxu0 0.0
    %689 = vmatpush.msra.mxu0 0.0
    %690 = vmatpush.msra.mxu0 0.0
    %691 = vmatpush.msra.mxu0 0.0
    %692 = vmatpush.msra.mxu0 0.0
    %693 = vmatpush.msra.mxu0 0.0
    %694 = vmatpush.msra.mxu0 0.0
    %695 = vmatpush.msra.mxu0 0.0
    %696 = vmatpush.msra.mxu0 0.0
    %697 = vmatpush.msra.mxu0 %v644
    %698 = vmatmul.f32.gmra.mxu0 %v677
    %v699 = vpop.f32.mrf.mxu0
    %v700 = vadd.f32 0.0, %v699
    %701 = vmatmul.f32.gmra.mxu0 %v680
    %v702 = vpop.f32.mrf.mxu0
    %v703 = vadd.f32 0.0, %v702
    %704 = vdwg.mxu0
    %v706 = vsel %vm271, %v603, 0
    %v709 = vsel %vm271, %v606, 0
    %711 = vmatpush.msra.mxu0 0.0
    %712 = vmatpush.msra.mxu0 0.0
    %713 = vmatpush.msra.mxu0 0.0
    %714 = vmatpush.msra.mxu0 0.0
    %715 = vmatpush.msra.mxu0 0.0
    %716 = vmatpush.msra.mxu0 0.0
    %717 = vmatpush.msra.mxu0 0.0
    %718 = vmatpush.msra.mxu0 0.0
    %719 = vmatpush.msra.mxu0 0.0
    %720 = vmatpush.msra.mxu0 0.0
    %721 = vmatpush.msra.mxu0 0.0
    %722 = vmatpush.msra.mxu0 0.0
    %723 = vmatpush.msra.mxu0 0.0
    %724 = vmatpush.msra.mxu0 0.0
    %725 = vmatpush.msra.mxu0 0.0
    %726 = vmatpush.msra.mxu0 %v645
    %727 = vmatmul.f32.gmra.mxu0 %v706
    %v728 = vpop.f32.mrf.mxu0
    %v729 = vadd.f32 0.0, %v728
    %730 = vmatmul.f32.gmra.mxu0 %v709
    %v731 = vpop.f32.mrf.mxu0
    %v732 = vadd.f32 0.0, %v731
    %733 = vdwg.mxu0
    %v735 = vsel %vm271, %v638, 0
    %v738 = vsel %vm271, %v641, 0
    %740 = vmatpush.msra.mxu0 0.0
    %741 = vmatpush.msra.mxu0 0.0
    %742 = vmatpush.msra.mxu0 0.0
    %743 = vmatpush.msra.mxu0 0.0
    %744 = vmatpush.msra.mxu0 0.0
    %745 = vmatpush.msra.mxu0 0.0
    %746 = vmatpush.msra.mxu0 0.0
    %747 = vmatpush.msra.mxu0 0.0
    %748 = vmatpush.msra.mxu0 0.0
    %749 = vmatpush.msra.mxu0 0.0
    %750 = vmatpush.msra.mxu0 0.0
    %751 = vmatpush.msra.mxu0 0.0
    %752 = vmatpush.msra.mxu0 0.0
    %753 = vmatpush.msra.mxu0 0.0
    %754 = vmatpush.msra.mxu0 0.0
    %755 = vmatpush.msra.mxu0 %v646
    %756 = vmatmul.f32.gmra.mxu0 %v735
    %v757 = vpop.f32.mrf.mxu0
    %v758 = vadd.f32 0.0, %v757
    %759 = vmatmul.f32.gmra.mxu0 %v738
    %v760 = vpop.f32.mrf.mxu0
    %v761 = vadd.f32 0.0, %v760
    %762 = vdwg.mxu0
    %v763 = vsel %vm117, %v671, 0.0
    %v764 = vsel %vm117, %v700, 0.0
    %v765 = vadd.f32 %v763, %v764
    %v766 = vsel %vm117, %v729, 0.0
    %v767 = vadd.f32 %v765, %v766
    %v768 = vsel %vm117, %v758, 0.0
    %v769 = vadd.f32 %v767, %v768
    %v770 = vsel %vm117, %v674, 0.0
    %v771 = vsel %vm117, %v703, 0.0
    %v772 = vadd.f32 %v770, %v771
    %v773 = vsel %vm117, %v732, 0.0
    %v774 = vadd.f32 %v772, %v773
    %v775 = vsel %vm117, %v761, 0.0
    %v776 = vadd.f32 %v774, %v775
    %v777 = vperm.slane %v115, 4
    %v778 = vadd.f32 %v769, %v777
    %v779 = vadd.f32 %v776, %v777
    %v780 = vadd.f32 %v778, %v111
    %v781 = vadd.f32 %v779, %v112
    %v782 = vsel %vm117, %v780, 0.0
    %783 = vadd.xlane.f32.xlu0 %v782
    %v784 = vpop.xlane.xlu0 %783
    %v785 = vsel %vm117, %v781, 0.0
    %786 = vadd.xlane.f32.xlu0 %v785
    %v787 = vpop.xlane.xlu0 %786
    %v788 = vmul.f32 %v784, %v130
    %v789 = vmul.f32 %v787, %v130
    %v790 = vsub.f32 %v780, %v788
    %v791 = vsub.f32 %v781, %v789
    %v792 = vmul.f32 %v790, %v790
    %v793 = vmul.f32 %v791, %v791
    %v794 = vsel %vm117, %v792, 0.0
    %795 = vadd.xlane.f32.xlu0 %v794
    %v796 = vpop.xlane.xlu0 %795
    %v797 = vsel %vm117, %v793, 0.0
    %798 = vadd.xlane.f32.xlu0 %v797
    %v799 = vpop.xlane.xlu0 %798
    %v800 = vmul.f32 %v796, %v130
    %v801 = vmul.f32 %v799, %v130
    %v802 = vadd.f32 %v800, 1e-06
    %v803 = vadd.f32 %v801, 1e-06
    %v804 = vrsqrt.pop %v802
    %v805 = vmul.f32 %v804, %v802
    %v806 = vmul.f32 %v805, %v804
    %v807 = vmul.f32 0.5, %v806
    %v808 = vsub.f32 1.5, %v807
    %v809 = vmul.f32 %v804, %v808
    %vm810 = vweird.f32 %v802
    %vm811 = vweird.f32 %v804
    %vm812 = vmor %vm810, %vm811
    %v813 = vsel %vm812, %v804, %v809
    %v814 = vrsqrt.pop %v803
    %v815 = vmul.f32 %v814, %v803
    %v816 = vmul.f32 %v815, %v814
    %v817 = vmul.f32 0.5, %v816
    %v818 = vsub.f32 1.5, %v817
    %v819 = vmul.f32 %v814, %v818
    %vm820 = vweird.f32 %v803
    %vm821 = vweird.f32 %v814
    %vm822 = vmor %vm820, %vm821
    %v823 = vsel %vm822, %v814, %v819
    %v824 = vmul.f32 %v790, %v813
    %v825 = vmul.f32 %v791, %v823
    %v826 = vperm.slane %v115, 5
    %v827 = vmul.f32 %v824, %v826
    %v828 = vmul.f32 %v825, %v826
    %v829 = vperm.slane %v115, 6
    %v830 = vadd.f32 %v827, %v829
    %v831 = vadd.f32 %v828, %v829
    %v832 = vld [vmem:[#allocation10] sm:$0xff]
    %v833 = vld [vmem:[#allocation10 + $0x8] sm:$0xff]
    %v834 = vld [vmem:[#allocation10 + $0x10] sm:$0xff]
    %v835 = vld [vmem:[#allocation10 + $0x18] sm:$0xff]
    %v836 = vperm.slane %v115, 7
    %v838 = vsel %vm117, %v830, 0
    %v841 = vsel %vm117, %v831, 0
    %843 = vmatpush.msra.mxu0 0.0
    %844 = vmatpush.msra.mxu0 0.0
    %845 = vmatpush.msra.mxu0 0.0
    %846 = vmatpush.msra.mxu0 0.0
    %847 = vmatpush.msra.mxu0 0.0
    %848 = vmatpush.msra.mxu0 0.0
    %849 = vmatpush.msra.mxu0 0.0
    %850 = vmatpush.msra.mxu0 0.0
    %851 = vmatpush.msra.mxu0 0.0
    %852 = vmatpush.msra.mxu0 0.0
    %853 = vmatpush.msra.mxu0 0.0
    %854 = vmatpush.msra.mxu0 0.0
    %855 = vmatpush.msra.mxu0 %v835
    %856 = vmatpush.msra.mxu0 %v834
    %857 = vmatpush.msra.mxu0 %v833
    %858 = vmatpush.msra.mxu0 %v832
    %859 = vmatmul.f32.gmra.mxu0 %v838
    %v860 = vpop.f32.mrf.mxu0
    %v861 = vadd.f32 %v836, %v860
    %862 = vmatmul.f32.gmra.mxu0 %v841
    %v863 = vpop.f32.mrf.mxu0
    %v864 = vadd.f32 %v836, %v863
    %865 = vdwg.mxu0
    %v866 = vmul.f32 %v861, 0.5
    %v867 = vmul.f32 %v864, 0.5
    %v868 = vmul.f32 %v861, 0.70710677
    %v869 = vmul.f32 %v864, 0.70710677
    %v870 = vmul.f32 %v868, %v868
    %v871 = vmin.f32 16.0, %v870
    %v872 = vmul.f32 %v871, 2.1237322e-06
    %v873 = vadd.f32 %v872, 0.00028619796
    %v874 = vmul.f32 %v871, %v873
    %v875 = vadd.f32 %v874, 0.0036580483
    %v876 = vmul.f32 %v871, %v875
    %v877 = vadd.f32 %v876, 0.05243302
    %v878 = vmul.f32 %v871, %v877
    %v879 = vadd.f32 %v878, 0.18741608
    %v880 = vmul.f32 %v871, %v879
    %v881 = vadd.f32 %v880, 1.1283791
    %v882 = vmul.f32 %v868, %v881
    %v883 = vmul.f32 %v871, 3.8918573e-05
    %v884 = vadd.f32 %v883, 0.001143296
    %v885 = vmul.f32 %v871, %v884
    %v886 = vadd.f32 %v885, 0.014752088
    %v887 = vmul.f32 %v871, %v886
    %v888 = vadd.f32 %v887, 0.112945676
    %v889 = vmul.f32 %v871, %v888
    %v890 = vadd.f32 %v889, 0.4994258
    %v891 = vmul.f32 %v871, %v890
    %v892 = vadd.f32 %v891, 1.0
    %v893 = vrcp.pop %v892
    %v894 = vmul.f32 %v892, %v893
    %v895 = vsub.f32 1.0, %v894
    %v896 = vmul.f32 %v893, %v895
    %v897 = vadd.f32 %v893, %v896
    %vm898 = vweird.f32 %v892
    %vm899 = vweird.f32 %v893
    %vm900 = vmor %vm898, %vm899
    %v901 = vsel %vm900, %v893, %v897
    %v902 = vand.u32 2147483647, %v892
    %vm903 = vcmp.eq.f32.partialorder %v902, 8.507059e+37
    %v904 = vand.u32 %v892, 2147483648
    %v905 = vor.u32 1.1754944e-38, %v904
    %v906 = vsel %vm903, %v905, %v901
    %v907 = vmul.f32 %v882, %v906
    %v908 = vmin.f32 %v907, 1.0
    %v909 = vmax.f32 %v908, -1.0
    %v910 = vmul.f32 %v869, %v869
    %v911 = vmin.f32 16.0, %v910
    %v912 = vmul.f32 %v911, 2.1237322e-06
    %v913 = vadd.f32 %v912, 0.00028619796
    %v914 = vmul.f32 %v911, %v913
    %v915 = vadd.f32 %v914, 0.0036580483
    %v916 = vmul.f32 %v911, %v915
    %v917 = vadd.f32 %v916, 0.05243302
    %v918 = vmul.f32 %v911, %v917
    %v919 = vadd.f32 %v918, 0.18741608
    %v920 = vmul.f32 %v911, %v919
    %v921 = vadd.f32 %v920, 1.1283791
    %v922 = vmul.f32 %v869, %v921
    %v923 = vmul.f32 %v911, 3.8918573e-05
    %v924 = vadd.f32 %v923, 0.001143296
    %v925 = vmul.f32 %v911, %v924
    %v926 = vadd.f32 %v925, 0.014752088
    %v927 = vmul.f32 %v911, %v926
    %v928 = vadd.f32 %v927, 0.112945676
    %v929 = vmul.f32 %v911, %v928
    %v930 = vadd.f32 %v929, 0.4994258
    %v931 = vmul.f32 %v911, %v930
    %v932 = vadd.f32 %v931, 1.0
    %v933 = vrcp.pop %v932
    %v934 = vmul.f32 %v932, %v933
    %v935 = vsub.f32 1.0, %v934
    %v936 = vmul.f32 %v933, %v935
    %v937 = vadd.f32 %v933, %v936
    %vm938 = vweird.f32 %v932
    %vm939 = vweird.f32 %v933
    %vm940 = vmor %vm938, %vm939
    %v941 = vsel %vm940, %v933, %v937
    %v942 = vand.u32 2147483647, %v932
    %vm943 = vcmp.eq.f32.partialorder %v942, 8.507059e+37
    %v944 = vand.u32 %v932, 2147483648
    %v945 = vor.u32 1.1754944e-38, %v944
    %v946 = vsel %vm943, %v945, %v941
    %v947 = vmul.f32 %v922, %v946
    %v948 = vmin.f32 %v947, 1.0
    %v949 = vmax.f32 %v948, -1.0
    %v950 = vadd.f32 %v909, 1.0
    %v951 = vadd.f32 %v949, 1.0
    %v952 = vmul.f32 %v866, %v950
    %v953 = vmul.f32 %v867, %v951
    %v954 = vld [vmem:[%s8] sm:$0xff]
    %v955 = vld [vmem:[%s8 + $0x8] sm:$0xff]
    %v956 = vld [vmem:[%s8 + $0x10] sm:$0xff]
    %v957 = vld [vmem:[%s8 + $0x18] sm:$0xff]
    %v958 = vld [vmem:[%s8 + $0x20] sm:$0xff]
    %v959 = vld [vmem:[%s8 + $0x28] sm:$0xff]
    %v960 = vld [vmem:[%s8 + $0x30] sm:$0xff]
    %v961 = vld [vmem:[%s8 + $0x38] sm:$0xff]
    %v962 = vperm.slane %v116, 0
    %vm963 = vcmask 523264
    %v965 = vsel %vm963, %v952, 0
    %v968 = vsel %vm963, %v953, 0
    %970 = vmatpush.msra.mxu0 0.0
    %971 = vmatpush.msra.mxu0 0.0
    %972 = vmatpush.msra.mxu0 0.0
    %973 = vmatpush.msra.mxu0 0.0
    %974 = vmatpush.msra.mxu0 0.0
    %975 = vmatpush.msra.mxu0 0.0
    %976 = vmatpush.msra.mxu0 0.0
    %977 = vmatpush.msra.mxu0 0.0
    %978 = vmatpush.msra.mxu0 %v961
    %979 = vmatpush.msra.mxu0 %v960
    %980 = vmatpush.msra.mxu0 %v959
    %981 = vmatpush.msra.mxu0 %v958
    %982 = vmatpush.msra.mxu0 %v957
    %983 = vmatpush.msra.mxu0 %v956
    %984 = vmatpush.msra.mxu0 %v955
    %985 = vmatpush.msra.mxu0 %v954
    %986 = vmatmul.f32.gmra.mxu0 %v965
    %v987 = vpop.f32.mrf.mxu0
    %v988 = vadd.f32 %v962, %v987
    %989 = vmatmul.f32.gmra.mxu0 %v968
    %v990 = vpop.f32.mrf.mxu0
    %v991 = vadd.f32 %v962, %v990
    %992 = vdwg.mxu0
    %v993 = vadd.f32 %v988, %v780
    %v994 = vadd.f32 %v991, %v781
    %995 = vst.msk [vmem:[#allocation11] sm:$0xff] %vm117, %v993
    %996 = vst.msk [vmem:[#allocation11 + $0x8] sm:$0xff] %vm117, %v994
    // Predicated region
    $region58: #{tpu_custom_call.1} parent=1 // pred_check
      _
    $region59: #{tpu_custom_call.1} parent=1 // pred_check_branch
      %998 = sbr.rel (0) target = $region61
    $region60: #{tpu_custom_call.1} parent=1 // pred_region
      %1000 = vsyncadd [#allocation4], 0
      %s1001 = sshll.u32 [#allocation11], 4
      %s1002 = int_to_ptr.vmem [resolvable:$true] %s1001
      %s1003 = sshll.u32 %s9, 4
      %s1004 = int_to_ptr.hbm [resolvable:$true] %s1003
      %1009 = dma.vmem_to_hbm [thread:$0]  %s1002, 256, %s1004, [#allocation4], 128, 128, 8
    $region61: #{tpu_custom_call.1} parent=1 // pred_fallthru
      _
    // Predicated region
    $region62: #{tpu_custom_call.1} parent=1 // pred_check
      _
    $region63: #{tpu_custom_call.1} parent=1 // pred_check_branch
      %1011 = sbr.rel (0) target = $region65
    $region64: #{tpu_custom_call.1} parent=1 // pred_region
      %1013 = dma.done [#allocation4], 256
    $region65: #{tpu_custom_call.1} parent=1 // pred_fallthru
      _
    %1014 = vsyncpa [#allocation3], 1
    %1015 = vsyncpa [#allocation6], 1
    %1016 = vsyncpa [#allocation9], 1
    %1017 = vsyncpa [#allocation4], 1

</llo_original>
